<compile_context>
chip_gen: v6e
topology: v6e:2x2x1
jax: 0.10.0
libtpu: 0.0.40
codegen_flags: <defaults>
</compile_context>

<pallas_src>
import jax
import jax.numpy as jnp
from jax.experimental import pallas as pl
from jax.experimental.pallas import tpu as pltpu


def _multitask_loss_kernel(losses_ref, sigma_ref, out_ref):
    # losses_ref / sigma_ref: (1, N) blocks in VMEM (any float dtype).
    # Cast on the loaded vregs; VPU cast rides an otherwise idle VALU slot.
    losses = losses_ref[...].astype(jnp.float32)   # (1, N)
    sigma = sigma_ref[...].astype(jnp.float32)     # (1, N)
    s2 = sigma * sigma
    # 1/(2*s2)*loss + 0.5*log(s2+1)  ==  0.5 * (loss/s2 + log(s2+1))
    # exact reciprocal (approx=False default) keeps the 1e-5 tolerance.
    terms = 0.5 * (losses * pl.reciprocal(s2) + jnp.log(s2 + 1.0))
    # Single cross-lane reduction -> scalar written straight to SMEM.
    out_ref[0, 0] = jnp.sum(terms)


def multitask_loss(losses: jax.Array, sigma: jax.Array) -> jax.Array:
    """losses: (num_losses,), sigma: (num_losses,) -> scalar f32."""
    n = losses.shape[0]
    # (N,) -> (1, N): metadata-only reshape, no extra HLO copy / HBM traffic.
    losses_2d = losses.reshape(1, n)
    sigma_2d = sigma.reshape(1, n)

    out = pl.pallas_call(
        _multitask_loss_kernel,
        out_shape=jax.ShapeDtypeStruct((1, 1), jnp.float32),
        # No grid: each (tiny) input is a single full-array VMEM block.
        in_specs=[
            pl.BlockSpec((1, n), lambda: (0, 0)),
            pl.BlockSpec((1, n), lambda: (0, 0)),
        ],
        # Scalar result lives in SMEM -> no masked vector store, no padded
        # VMEM output-tile writeback.
        out_specs=pl.BlockSpec(memory_space=pltpu.MemorySpace.SMEM),
        # Tell XLA this custom call is ~free so it doesn't serialize
        # independent work around it.
        cost_estimate=pl.CostEstimate(
            flops=6 * n, transcendentals=n, bytes_accessed=12 * n
        ),
    )(losses_2d, sigma_2d)
    return out[0, 0]


def multitask_loss_ref(losses, sigma):
    losses = losses.astype(jnp.float32)
    sigma = sigma.astype(jnp.float32)
    s2 = sigma * sigma
    return jnp.sum(losses / (2.0 * s2) + 0.5 * jnp.log(s2 + 1.0))


if __name__ == "__main__":
    num_losses = 4

    # Deterministic parameter init, matching nn.Parameter(torch.ones(n)/n).
    sigma = jnp.ones((num_losses,), dtype=jnp.float32) / num_losses

    # Deterministic example per-task losses (non-negative, like real losses).
    key = jax.random.PRNGKey(0)
    losses = jax.random.uniform(key, (num_losses,), dtype=jnp.float32) * 2.0

    out = multitask_loss(losses, sigma)
    out = jax.block_until_ready(out)

    ref = multitask_loss_ref(losses, sigma)
    assert jnp.allclose(out, ref, rtol=1e-5, atol=1e-5), (out, ref)

    # Also exercise the in-kernel dtype-promotion path (bf16 inputs), with a
    # looser tolerance appropriate for bf16 inputs.
    out_bf16 = jax.block_until_ready(
        multitask_loss(losses.astype(jnp.bfloat16), sigma.astype(jnp.bfloat16))
    )
    ref_bf16 = multitask_loss_ref(
        losses.astype(jnp.bfloat16), sigma.astype(jnp.bfloat16)
    )
    assert jnp.allclose(out_bf16, ref_bf16, rtol=1e-2, atol=1e-2), (out_bf16, ref_bf16)

    print("KERNEL_OK")
</pallas_src>

<mosaic_0001>
module attributes {stable_mosaic.version = 11 : i64} {
  func.func @_multitask_loss_kernel(%arg0: memref<1x4xf32, #tpu.memory_space<vmem>>, %arg1: memref<1x4xf32, #tpu.memory_space<vmem>>, %arg2: memref<1x1xf32, #tpu.memory_space<smem>>) attributes {dimension_semantics = [], scalar_prefetch = 0 : i64, scratch_operands = 0 : i64, tpu.core_type = #tpu.core_type<tc>} {
    %c0 = arith.constant 0 : index
    %c0_0 = arith.constant 0 : index
    %0 = vector.load %arg0[%c0, %c0_0] : memref<1x4xf32, #tpu.memory_space<vmem>>, vector<1x4xf32>
    %c0_1 = arith.constant 0 : index
    %c0_2 = arith.constant 0 : index
    %1 = vector.load %arg1[%c0_1, %c0_2] : memref<1x4xf32, #tpu.memory_space<vmem>>, vector<1x4xf32>
    %2 = arith.mulf %1, %1 : vector<1x4xf32>
    %3 = tpu.reciprocal %2 : vector<1x4xf32> -> vector<1x4xf32>
    %4 = arith.mulf %0, %3 : vector<1x4xf32>
    %cst = arith.constant 1.000000e+00 : f32
    %5 = vector.broadcast %cst : f32 to vector<1x4xf32>
    %6 = arith.addf %2, %5 : vector<1x4xf32>
    %7 = math.log %6 : vector<1x4xf32>
    %8 = arith.addf %4, %7 : vector<1x4xf32>
    %cst_3 = arith.constant 5.000000e-01 : f32
    %9 = vector.broadcast %cst_3 : f32 to vector<1x4xf32>
    %10 = arith.mulf %9, %8 : vector<1x4xf32>
    %11 = vector.shape_cast %10 : vector<1x4xf32> to vector<1x1x4xf32>
    %cst_4 = arith.constant dense<0.000000e+00> : vector<1xf32>
    %12 = vector.multi_reduction <add>, %11, %cst_4 [1, 2] : vector<1x1x4xf32> to vector<1xf32>
    %13 = vector.shape_cast %12 : vector<1xf32> to vector<1x1x1xf32>
    %14 = vector.extract %13[0, 0, 0] : f32 from vector<1x1x1xf32>
    %c0_5 = arith.constant 0 : index
    %c0_6 = arith.constant 0 : index
    %15 = memref.load %arg2[%c0_5, %c0_6] : memref<1x1xf32, #tpu.memory_space<smem>>
    memref.store %14, %arg2[%c0_5, %c0_6] : memref<1x1xf32, #tpu.memory_space<smem>>
    return
  }
}

</mosaic_0001>

<llo_original>
// kernel: tpu_custom_call.1
$region0: #{tpu_custom_call.1}
  #allocation0 [shape = 'u32[]', space=smem, size = 0x4, offset = 0x4, fixed_abs, tag = 'smem constant byte address 0x4 - core index']
  #allocation1 [shape = 'u32[144,128]{1,0:T(1,128)}', space=vmem, size = 0x12000, scoped, tag = 'internal scratch']
  %s0 = inlined_call_operand.hbm [shape: f32[1,4], index: 0, kind: input, shape index: {}]
  %s1 = inlined_call_operand.vmem [shape: f32[1,4], index: 1, kind: input, shape index: {}]
  %s2 = inlined_call_operand.hbm [shape: f32[1,1], index: 2, kind: output, shape index: {}]
  %s3 = sld [smem:[#allocation0]]
  $region22: #{tpu_custom_call.1} parent=0
    _
  %s5 = ssub.s32 1, %s3
  %s6 = scalar_select 0, %s5, %s3
  $region1: #{tpu_custom_call.1} parent=0
    #allocation2 [shape = 'u8[512]{0}', space=vmem, size = 0x400, scoped, tag = 'input window, operand 0, single buffered']
    #allocation3 [shape = 's32[1]{0}', space=sflag, size = 0x4, scoped, tag = 'scoped memory for tpu_custom_call.1']
    #allocation4 [shape = 's32[1]{0}', space=sflag, size = 0x4, scoped, tag = 'scoped memory for tpu_custom_call.1']
    #allocation5 [shape = 'u8[512]{0}', space=smem, size = 0x200, scoped, tag = 'output window, operand 0, single buffered']
    %7 = vsyncpa [#allocation3], 0
    %8 = vsyncpa [#allocation4], 0
    // Predicated region
    $region2: #{tpu_custom_call.1} parent=1 // pred_check
      _
    $region3: #{tpu_custom_call.1} parent=1 // pred_check_branch
      %10 = sbr.rel (0) target = $region5
    $region4: #{tpu_custom_call.1} parent=1 // pred_region
      %s12 = ssub.s32 16, 16
      %13 = vsyncadd [#allocation3], %s12
      %s15 = sshll.u32 [#allocation2], 4
      %s16 = int_to_ptr.vmem [resolvable:$true] %s15
      %18 = dma.hbm_to_vmem [thread:$0]  %s0, 16, %s16, [#allocation3]
    $region5: #{tpu_custom_call.1} parent=1 // pred_fallthru
      _
    // Predicated region
    $region6: #{tpu_custom_call.1} parent=1 // pred_check
      _
    $region7: #{tpu_custom_call.1} parent=1 // pred_check_branch
      %20 = sbr.rel (0) target = $region9
    $region8: #{tpu_custom_call.1} parent=1 // pred_region
      _
    $region9: #{tpu_custom_call.1} parent=1 // pred_fallthru
      _
    // Predicated region
    $region10: #{tpu_custom_call.1} parent=1 // pred_check
      _
    $region11: #{tpu_custom_call.1} parent=1 // pred_check_branch
      %22 = sbr.rel (0) target = $region13
    $region12: #{tpu_custom_call.1} parent=1 // pred_region
      %23 = dma.done [#allocation3], 16
    $region13: #{tpu_custom_call.1} parent=1 // pred_fallthru
      _
    %v24 = vld [vmem:[#allocation2] sm:$0x1]
    %v25 = vld [vmem:[%s1] sm:$0x1]
    %v26 = vmul.f32 %v25, %v25
    %v27 = vrcp.pop %v26
    %v28 = vmul.f32 %v24, %v27
    %v29 = vadd.f32 %v26, 1.0
    %v30 = vlog2.pop %v29
    %v31 = vmul.f32 %v30, 0.6931472
    %v32 = vadd.f32 %v28, %v31
    %v33 = vmul.f32 %v32, 0.5
    %vm34 = vcmask 24576
    %v35 = vsel %vm34, %v33, 0.0
    %36 = vadd.xlane.f32.xlu0 %v35
    %v37 = vpop.xlane.xlu0 %36
    %v38 = vrot.slane %v37, 4
    %v39 = vadd.f32 %v37, %v38
    %v40 = vrot.slane %v39, 2
    %v41 = vadd.f32 %v39, %v40
    %v42 = vrot.slane %v41, 1
    %v43 = vadd.f32 %v41, %v42
    %s44 = vtos %v43
    %s45 = scalar_lea.smem [#allocation5], 0
    %46 = sst [smem:[%s45]] %s44
    // Predicated region
    $region14: #{tpu_custom_call.1} parent=1 // pred_check
      _
    $region15: #{tpu_custom_call.1} parent=1 // pred_check_branch
      %48 = sbr.rel (0) target = $region17
    $region16: #{tpu_custom_call.1} parent=1 // pred_region
      %s50 = ssub.s32 16, 16
      %51 = vsyncadd [#allocation4], %s50
      %54 = dma.smem_to_hbm [#allocation5], 16, %s2, [#allocation4]
    $region17: #{tpu_custom_call.1} parent=1 // pred_fallthru
      _
    // Predicated region
    $region18: #{tpu_custom_call.1} parent=1 // pred_check
      _
    $region19: #{tpu_custom_call.1} parent=1 // pred_check_branch
      %56 = sbr.rel (0) target = $region21
    $region20: #{tpu_custom_call.1} parent=1 // pred_region
      %57 = dma.done [#allocation4], 16
    $region21: #{tpu_custom_call.1} parent=1 // pred_fallthru
      _
    %58 = sfence
    %59 = vsyncpa [#allocation3], 1
    %60 = vsyncpa [#allocation4], 1

</llo_original>
